<compile_context>
chip_gen: v6e
topology: v6e:2x2x1
jax: 0.10.0
libtpu: 0.0.40
codegen_flags: <defaults>
</compile_context>

<pallas_src>
import math

import jax
import jax.numpy as jnp
import numpy as np
from jax.experimental import pallas as pl
from jax.experimental.pallas import tpu as pltpu

_CG_SCALE = 1.0 / math.sqrt(2.0)  # Clebsch-Gordan normalization for 1e x 1e -> 1e

_VMEM_LIMIT_BYTES = 48 * 1024 * 1024   # > v5e 16 MiB default scope, < v7x 64 MiB physical
_VMEM_TILE_BUDGET = 32 * 1024 * 1024   # target for double-buffered per-step footprint


def _tp_kernel(l1_ref, l2_ref, w_ref, o_ref):
    # Block layout:
    #   l1_ref: (3, C, TB)  xyz component x channel (sublanes) x batch (lanes)
    #   l2_ref: (3, TB)
    #   w_ref : (C, TB)
    #   o_ref : (3, C, TB)
    f32 = jnp.float32
    x1 = l1_ref[0].astype(f32)          # (C, TB) full-vreg loads
    y1 = l1_ref[1].astype(f32)
    z1 = l1_ref[2].astype(f32)
    # (1, TB) slices; broadcast over channels is a cheap sublane broadcast.
    x2 = l2_ref[0:1, :].astype(f32)
    y2 = l2_ref[1:2, :].astype(f32)
    z2 = l2_ref[2:3, :].astype(f32)

    s = w_ref[...].astype(f32) * _CG_SCALE   # (C, TB)

    out_dtype = o_ref.dtype
    # Direct per-component full-width unmasked stores (no concat, no temp relayout).
    o_ref[0] = (s * (y1 * z2 - z1 * y2)).astype(out_dtype)
    o_ref[1] = (s * (z1 * x2 - x1 * z2)).astype(out_dtype)
    o_ref[2] = (s * (x1 * y2 - y1 * x2)).astype(out_dtype)


def _pick_batch_tile(B, C, itemsize):
    """Largest 128-multiple batch tile dividing B that fits the VMEM budget,
    preferring >= 2 grid steps so v7x's two TensorCores both get work."""
    if B % 128 != 0:
        return B  # full-batch block (block dim == full array dim is always legal)
    bytes_per_row = (3 * C + 3 + C + 3 * C) * itemsize  # L1 + L2 + W + out per batch row
    cap = _VMEM_TILE_BUDGET // (2 * max(bytes_per_row, 1))  # x2 for double buffering
    cap = max(128, (cap // 128) * 128)
    candidates = [t for t in range(128, min(B, cap) + 1, 128) if B % t == 0]
    if not candidates:
        return B
    multi_step = [t for t in candidates if B // t >= 2]
    return max(multi_step) if multi_step else max(candidates)


def tensor_product_forward_batch_last(l1, l2, w, *, batch_tile=None):
    """Recommended entry point (no transposes around the kernel).

    l1: (3, C, B), l2: (3, B), w: (C, B)  ->  out: (3, C, B)
    """
    three, C, B = l1.shape
    assert three == 3
    assert l2.shape == (3, B)
    assert w.shape == (C, B)

    tb = batch_tile if batch_tile is not None else _pick_batch_tile(B, C, l1.dtype.itemsize)
    assert B % tb == 0, "batch must be divisible by the batch tile"
    assert tb == B or tb % 128 == 0, "batch tile must be a multiple of 128 (lane-dense)"

    return pl.pallas_call(
        _tp_kernel,
        out_shape=jax.ShapeDtypeStruct((3, C, B), l1.dtype),
        grid_spec=pltpu.PrefetchScalarGridSpec(
            num_scalar_prefetch=0,
            grid=(B // tb,),
            in_specs=[
                pl.BlockSpec((3, C, tb), lambda i: (0, 0, i)),
                pl.BlockSpec((3, tb), lambda i: (0, i)),
                pl.BlockSpec((C, tb), lambda i: (0, i)),
            ],
            out_specs=pl.BlockSpec((3, C, tb), lambda i: (0, 0, i)),
        ),
        compiler_params=pltpu.CompilerParams(
            dimension_semantics=("parallel",),          # batch axis -> both v7x TCs
            vmem_limit_bytes=_VMEM_LIMIT_BYTES,
        ),
    )(l1, l2, w)


def tensor_product_forward(L1, L2, W, *, batch_tile=None):
    """Module-compatible e3nn-flat interface: L1 (B, C*3), L2 (B, 3), W (B, C) -> (B, C*3).

    The transposes here are interface glue only (each is an extra HBM pass).  A
    surrounding model that keeps the batch-last layout end-to-end should call
    `tensor_product_forward_batch_last` directly and skip them entirely.
    """
    B, C3 = L1.shape
    C = C3 // 3
    assert C3 == 3 * C
    assert L2.shape == (B, 3)
    assert W.shape == (B, C)

    l1 = jnp.transpose(L1.reshape(B, C, 3), (2, 1, 0))   # (3, C, B)
    l2 = L2.T                                            # (3, B)
    w = W.T                                              # (C, B)
    out = tensor_product_forward_batch_last(l1, l2, w, batch_tile=batch_tile)
    return jnp.transpose(out, (2, 1, 0)).reshape(B, C3)


def _reference(L1, L2, W):
    B, C3 = L1.shape
    C = C3 // 3
    l1 = L1.reshape(B, C, 3)
    cross = jnp.cross(l1, L2[:, None, :])
    return np.asarray((W[:, :, None] * _CG_SCALE * cross).reshape(B, C3), dtype=np.float32)


if __name__ == "__main__":
    B, C = 1024, 32  # batch, number of l=1 channels; weight_numel = C

    key = jax.random.PRNGKey(0)
    k1, k2, k3 = jax.random.split(key, 3)
    L1 = jax.random.normal(k1, (B, C * 3), dtype=jnp.float32)
    L2 = jax.random.normal(k2, (B, 3), dtype=jnp.float32)
    # Deterministic "weights" (the module's learned W is an input to forward).
    W = jax.random.normal(k3, (B, C), dtype=jnp.float32)

    ref = _reference(L1, L2, W)

    # 1) Recommended batch-last path: no transposes around the pallas_call.
    l1_bl = jnp.transpose(L1.reshape(B, C, 3), (2, 1, 0))   # (3, C, B)
    l2_bl = L2.T                                            # (3, B)
    w_bl = W.T                                              # (C, B)
    out_bl = jax.block_until_ready(tensor_product_forward_batch_last(l1_bl, l2_bl, w_bl))
    out_bl_flat = np.transpose(np.asarray(out_bl), (2, 1, 0)).reshape(B, C * 3)
    np.testing.assert_allclose(out_bl_flat, ref, rtol=1e-5, atol=1e-5)

    # 2) Module-compatible e3nn-flat interface (transposes are glue only).
    out = jax.block_until_ready(tensor_product_forward(L1, L2, W))
    np.testing.assert_allclose(np.asarray(out), ref, rtol=1e-5, atol=1e-5)

    # 3) bf16 I/O (f32 compute in-kernel) — halves HBM traffic on v6e/v7x.
    L1b = L1.astype(jnp.bfloat16)
    L2b = L2.astype(jnp.bfloat16)
    Wb = W.astype(jnp.bfloat16)
    out_b = jax.block_until_ready(tensor_product_forward(L1b, L2b, Wb))
    ref_b = _reference(L1b.astype(jnp.float32), L2b.astype(jnp.float32),
                       Wb.astype(jnp.float32))
    np.testing.assert_allclose(np.asarray(out_b.astype(jnp.float32)), ref_b,
                               rtol=2e-2, atol=2e-2)

    print("KERNEL_OK")
</pallas_src>

<mosaic_0001>
module attributes {stable_mosaic.version = 11 : i64} {
  func.func @_tp_kernel(%arg0: i32, %arg1: memref<3x32x512xf32, #tpu.memory_space<vmem>>, %arg2: memref<3x512xf32, #tpu.memory_space<vmem>>, %arg3: memref<32x512xf32, #tpu.memory_space<vmem>>, %arg4: memref<3x32x512xf32, #tpu.memory_space<vmem>>) attributes {dimension_semantics = [#tpu.dimension_semantics<parallel>], iteration_bounds = array<i64: 2>, scalar_prefetch = 0 : i64, scratch_operands = 0 : i64, tpu.core_type = #tpu.core_type<tc>, window_params = [{transform_indices = @transform_0, window_bounds = array<i64: 3, 32, 512>}, {transform_indices = @transform_1, window_bounds = array<i64: 3, 512>}, {transform_indices = @transform_2, window_bounds = array<i64: 32, 512>}, {transform_indices = @transform_3, window_bounds = array<i64: 3, 32, 512>}]} {
    %c0 = arith.constant 0 : index
    %c0_0 = arith.constant 0 : index
    %c0_1 = arith.constant 0 : index
    %0 = vector.load %arg1[%c0, %c0_0, %c0_1] : memref<3x32x512xf32, #tpu.memory_space<vmem>>, vector<1x32x512xf32>
    %1 = vector.shape_cast %0 : vector<1x32x512xf32> to vector<32x512xf32>
    %c1 = arith.constant 1 : index
    %c0_2 = arith.constant 0 : index
    %c0_3 = arith.constant 0 : index
    %2 = vector.load %arg1[%c1, %c0_2, %c0_3] : memref<3x32x512xf32, #tpu.memory_space<vmem>>, vector<1x32x512xf32>
    %3 = vector.shape_cast %2 : vector<1x32x512xf32> to vector<32x512xf32>
    %c2 = arith.constant 2 : index
    %c0_4 = arith.constant 0 : index
    %c0_5 = arith.constant 0 : index
    %4 = vector.load %arg1[%c2, %c0_4, %c0_5] : memref<3x32x512xf32, #tpu.memory_space<vmem>>, vector<1x32x512xf32>
    %5 = vector.shape_cast %4 : vector<1x32x512xf32> to vector<32x512xf32>
    %c0_6 = arith.constant 0 : index
    %c0_7 = arith.constant 0 : index
    %6 = vector.load %arg2[%c0_6, %c0_7] : memref<3x512xf32, #tpu.memory_space<vmem>>, vector<1x512xf32>
    %c1_8 = arith.constant 1 : index
    %c0_9 = arith.constant 0 : index
    %7 = vector.load %arg2[%c1_8, %c0_9] : memref<3x512xf32, #tpu.memory_space<vmem>>, vector<1x512xf32>
    %c2_10 = arith.constant 2 : index
    %c0_11 = arith.constant 0 : index
    %8 = vector.load %arg2[%c2_10, %c0_11] : memref<3x512xf32, #tpu.memory_space<vmem>>, vector<1x512xf32>
    %c0_12 = arith.constant 0 : index
    %c0_13 = arith.constant 0 : index
    %9 = vector.load %arg3[%c0_12, %c0_13] : memref<32x512xf32, #tpu.memory_space<vmem>>, vector<32x512xf32>
    %cst = arith.constant 0.707106769 : f32
    %10 = vector.broadcast %cst : f32 to vector<32x512xf32>
    %11 = arith.mulf %9, %10 : vector<32x512xf32>
    %12 = vector.broadcast %8 : vector<1x512xf32> to vector<32x512xf32>
    %13 = arith.mulf %3, %12 : vector<32x512xf32>
    %14 = vector.broadcast %7 : vector<1x512xf32> to vector<32x512xf32>
    %15 = arith.mulf %5, %14 : vector<32x512xf32>
    %16 = arith.subf %13, %15 : vector<32x512xf32>
    %17 = arith.mulf %11, %16 : vector<32x512xf32>
    %c0_14 = arith.constant 0 : index
    %c0_15 = arith.constant 0 : index
    %c0_16 = arith.constant 0 : index
    %18 = vector.load %arg4[%c0_14, %c0_15, %c0_16] : memref<3x32x512xf32, #tpu.memory_space<vmem>>, vector<1x32x512xf32>
    %19 = vector.shape_cast %18 : vector<1x32x512xf32> to vector<32x512xf32>
    %20 = vector.shape_cast %17 : vector<32x512xf32> to vector<1x32x512xf32>
    tpu.vector_store %arg4[%c0_14, %c0_15, %c0_16], %20 {strides = array<i32>} : memref<3x32x512xf32, #tpu.memory_space<vmem>>, vector<1x32x512xf32>,
    %21 = vector.broadcast %6 : vector<1x512xf32> to vector<32x512xf32>
    %22 = arith.mulf %5, %21 : vector<32x512xf32>
    %23 = vector.broadcast %8 : vector<1x512xf32> to vector<32x512xf32>
    %24 = arith.mulf %1, %23 : vector<32x512xf32>
    %25 = arith.subf %22, %24 : vector<32x512xf32>
    %26 = arith.mulf %11, %25 : vector<32x512xf32>
    %c1_17 = arith.constant 1 : index
    %c0_18 = arith.constant 0 : index
    %c0_19 = arith.constant 0 : index
    %27 = vector.load %arg4[%c1_17, %c0_18, %c0_19] : memref<3x32x512xf32, #tpu.memory_space<vmem>>, vector<1x32x512xf32>
    %28 = vector.shape_cast %27 : vector<1x32x512xf32> to vector<32x512xf32>
    %29 = vector.shape_cast %26 : vector<32x512xf32> to vector<1x32x512xf32>
    tpu.vector_store %arg4[%c1_17, %c0_18, %c0_19], %29 {strides = array<i32>} : memref<3x32x512xf32, #tpu.memory_space<vmem>>, vector<1x32x512xf32>,
    %30 = vector.broadcast %7 : vector<1x512xf32> to vector<32x512xf32>
    %31 = arith.mulf %1, %30 : vector<32x512xf32>
    %32 = vector.broadcast %6 : vector<1x512xf32> to vector<32x512xf32>
    %33 = arith.mulf %3, %32 : vector<32x512xf32>
    %34 = arith.subf %31, %33 : vector<32x512xf32>
    %35 = arith.mulf %11, %34 : vector<32x512xf32>
    %c2_20 = arith.constant 2 : index
    %c0_21 = arith.constant 0 : index
    %c0_22 = arith.constant 0 : index
    %36 = vector.load %arg4[%c2_20, %c0_21, %c0_22] : memref<3x32x512xf32, #tpu.memory_space<vmem>>, vector<1x32x512xf32>
    %37 = vector.shape_cast %36 : vector<1x32x512xf32> to vector<32x512xf32>
    %38 = vector.shape_cast %35 : vector<32x512xf32> to vector<1x32x512xf32>
    tpu.vector_store %arg4[%c2_20, %c0_21, %c0_22], %38 {strides = array<i32>} : memref<3x32x512xf32, #tpu.memory_space<vmem>>, vector<1x32x512xf32>,
    return
  }
  func.func @transform_0(%arg0: i32) -> (i32, i32, i32) {
    %c0_i32 = arith.constant 0 : i32
    %c0_i32_0 = arith.constant 0 : i32
    %c0_i32_1 = arith.constant 0 : i32
    return %c0_i32, %c0_i32_0, %arg0 : i32, i32, i32
  }
  func.func @transform_1(%arg0: i32) -> (i32, i32) {
    %c0_i32 = arith.constant 0 : i32
    %c0_i32_0 = arith.constant 0 : i32
    return %c0_i32, %arg0 : i32, i32
  }
  func.func @transform_2(%arg0: i32) -> (i32, i32) {
    %c0_i32 = arith.constant 0 : i32
    %c0_i32_0 = arith.constant 0 : i32
    return %c0_i32, %arg0 : i32, i32
  }
  func.func @transform_3(%arg0: i32) -> (i32, i32, i32) {
    %c0_i32 = arith.constant 0 : i32
    %c0_i32_0 = arith.constant 0 : i32
    %c0_i32_1 = arith.constant 0 : i32
    return %c0_i32, %c0_i32_0, %arg0 : i32, i32, i32
  }
}

</mosaic_0001>

<llo_original>
// kernel: tpu_custom_call.1
$region0: #{tpu_custom_call.1}
  #allocation0 [shape = 'u32[]', space=smem, size = 0x4, offset = 0x4, fixed_abs, tag = 'smem constant byte address 0x4 - core index']
  #allocation1 [shape = 'u32[144,128]{1,0:T(1,128)}', space=vmem, size = 0x12000, scoped, tag = 'internal scratch']
  %s0 = inlined_call_operand.hbm [shape: f32[3,32,1024], index: 0, kind: input, shape index: {}]
  %s1 = inlined_call_operand.hbm [shape: f32[3,1024], index: 1, kind: input, shape index: {}]
  %s2 = inlined_call_operand.hbm [shape: f32[32,1024], index: 2, kind: input, shape index: {}]
  %s3 = inlined_call_operand.hbm [shape: f32[3,32,1024], index: 3, kind: output, shape index: {}]
  %s4 = sld [smem:[#allocation0]]
  $region57: #{tpu_custom_call.1} parent=0
    _
  %s6 = ssub.s32 1, %s4
  %s7 = scalar_select 0, %s6, %s4
  $region1: #{tpu_custom_call.1} parent=0
    #allocation2 [shape = 'u8[393216]{0}', space=vmem, size = 0x60000, scoped, tag = 'input window, operand 0']
    #allocation3 [shape = 's32[2]{0}', space=sflag, size = 0x8, scoped, tag = 'scoped memory for tpu_custom_call.1']
    #allocation4 [shape = 's32[2]{0}', space=sflag, size = 0x8, scoped, tag = 'scoped memory for tpu_custom_call.1']
    #allocation5 [shape = 'u8[16384]{0}', space=vmem, size = 0x4000, scoped, tag = 'input window, operand 1']
    #allocation6 [shape = 's32[2]{0}', space=sflag, size = 0x8, scoped, tag = 'scoped memory for tpu_custom_call.1']
    #allocation7 [shape = 'u8[131072]{0}', space=vmem, size = 0x20000, scoped, tag = 'input window, operand 2']
    #allocation8 [shape = 'u8[393216]{0}', space=vmem, size = 0x60000, scoped, tag = 'output window, operand 0']
    %8 = vsyncpa [#allocation3], 0
    %s9 = scalar_lea.sflag [#allocation3], 1
    %10 = vsyncpa %s9, 0
    %11 = vsyncpa [#allocation6], 0
    %s12 = scalar_lea.sflag [#allocation6], 1
    %13 = vsyncpa %s12, 0
    %14 = vsyncpa [#allocation4], 0
    %s15 = scalar_lea.sflag [#allocation4], 1
    %16 = vsyncpa %s15, 0
    loop: start=0, step=1, limit=4
    $region2: #{tpu_custom_call.1} parent=1 // loop_pre_header
      _
    $region3: #{tpu_custom_call.1} parent=1 // loop_header
      %s18 = sphi 0, %s22
      %p19 = scmp.ge.s32.totalorder %s18, 4
      %s28 = sphi 0, %s30
      %s31 = sphi 0, %s28
      %s32 = sphi 0, %s31
      %s48 = sphi 0, %s32
      %s54 = sphi 0, %s56
      %s57 = sphi 0, %s54
      %s58 = sphi 0, %s57
      %s74 = sphi 0, %s58
      %s80 = sphi 0, %s82
      %s83 = sphi 0, %s80
      %s84 = sphi 0, %s83
      %s100 = sphi 0, %s84
      %s106 = sphi 0, %s108
      %s109 = sphi 0, %s106
      %s110 = sphi 0, %s109
      %s126 = sphi 0, %s110
    $region4: #{tpu_custom_call.1} parent=1 // loop_header_branch
      %21 = sbr.rel (%p19) target = $region8
    $region5: #{tpu_custom_call.1} parent=1 // loop_body
      %s23 = ssub.s32 %s18, 1
      %s24 = ssub.s32 %s18, 2
      %s25 = sadd.s32 %s18, 1
      %s26 = ssub.s32 %s18, %s25
      %p27 = scmp.eq.s32.totalorder %s26, 0
      %s29 = sadd.s32 %s28, 1
      %s30 = scalar_select %p27, %s28, %s29
      %p33 = pneg %p27
      %p34 = scmp.eq.s32.totalorder %s18, 1
      %p35 = por %p33, %p34
      %p36 = scmp.ne.s32.totalorder %s28, %s31
      %p37 = scmp.eq.s32.totalorder %s18, 0
      %p38 = por %p36, %p37
      %p39 = scmp.ne.s32.totalorder %s28, %s31
      %p40 = scmp.eq.s32.totalorder %s23, 1
      %p41 = por %p39, %p40
      %p42 = scmp.ne.s32.totalorder %s31, %s32
      %p43 = scmp.eq.s32.totalorder %s23, 0
      %p44 = por %p42, %p43
      %p45 = scmp.ne.s32.totalorder %s31, %s32
      %p46 = scmp.eq.s32.totalorder %s24, 1
      %p47 = por %p45, %p46
      %p49 = scmp.ne.s32.totalorder %s32, %s48
      %p50 = scmp.eq.s32.totalorder %s24, 0
      %p51 = por %p49, %p50
      %s52 = ssub.s32 %s18, %s25
      %p53 = scmp.eq.s32.totalorder %s52, 0
      %s55 = sadd.s32 %s54, 1
      %s56 = scalar_select %p53, %s54, %s55
      %p59 = pneg %p53
      %p60 = scmp.eq.s32.totalorder %s18, 1
      %p61 = por %p59, %p60
      %p62 = scmp.ne.s32.totalorder %s54, %s57
      %p63 = scmp.eq.s32.totalorder %s18, 0
      %p64 = por %p62, %p63
      %p65 = scmp.ne.s32.totalorder %s54, %s57
      %p66 = scmp.eq.s32.totalorder %s23, 1
      %p67 = por %p65, %p66
      %p68 = scmp.ne.s32.totalorder %s57, %s58
      %p69 = scmp.eq.s32.totalorder %s23, 0
      %p70 = por %p68, %p69
      %p71 = scmp.ne.s32.totalorder %s57, %s58
      %p72 = scmp.eq.s32.totalorder %s24, 1
      %p73 = por %p71, %p72
      %p75 = scmp.ne.s32.totalorder %s58, %s74
      %p76 = scmp.eq.s32.totalorder %s24, 0
      %p77 = por %p75, %p76
      %s78 = ssub.s32 %s18, %s25
      %p79 = scmp.eq.s32.totalorder %s78, 0
      %s81 = sadd.s32 %s80, 1
      %s82 = scalar_select %p79, %s80, %s81
      %p85 = pneg %p79
      %p86 = scmp.eq.s32.totalorder %s18, 1
      %p87 = por %p85, %p86
      %p88 = scmp.ne.s32.totalorder %s80, %s83
      %p89 = scmp.eq.s32.totalorder %s18, 0
      %p90 = por %p88, %p89
      %p91 = scmp.ne.s32.totalorder %s80, %s83
      %p92 = scmp.eq.s32.totalorder %s23, 1
      %p93 = por %p91, %p92
      %p94 = scmp.ne.s32.totalorder %s83, %s84
      %p95 = scmp.eq.s32.totalorder %s23, 0
      %p96 = por %p94, %p95
      %p97 = scmp.ne.s32.totalorder %s83, %s84
      %p98 = scmp.eq.s32.totalorder %s24, 1
      %p99 = por %p97, %p98
      %p101 = scmp.ne.s32.totalorder %s84, %s100
      %p102 = scmp.eq.s32.totalorder %s24, 0
      %p103 = por %p101, %p102
      %s104 = ssub.s32 %s18, %s25
      %p105 = scmp.eq.s32.totalorder %s104, 0
      %s107 = sadd.s32 %s106, 1
      %s108 = scalar_select %p105, %s106, %s107
      %p111 = pneg %p105
      %p112 = scmp.eq.s32.totalorder %s18, 1
      %p113 = por %p111, %p112
      %p114 = scmp.ne.s32.totalorder %s106, %s109
      %p115 = scmp.eq.s32.totalorder %s18, 0
      %p116 = por %p114, %p115
      %p117 = scmp.ne.s32.totalorder %s106, %s109
      %p118 = scmp.eq.s32.totalorder %s23, 1
      %p119 = por %p117, %p118
      %p120 = scmp.ne.s32.totalorder %s109, %s110
      %p121 = scmp.eq.s32.totalorder %s23, 0
      %p122 = por %p120, %p121
      %p123 = scmp.ne.s32.totalorder %s109, %s110
      %p124 = scmp.eq.s32.totalorder %s24, 1
      %p125 = por %p123, %p124
      %p127 = scmp.ne.s32.totalorder %s110, %s126
      %p128 = scmp.eq.s32.totalorder %s24, 0
      %p129 = por %p127, %p128
      %p130 = scmp.le.s32.totalorder 1, %s18
      %p131 = scmp.lt.s32.totalorder %s18, 3
      %p132 = pnand %p130, %p131
      %p133 = pneg %p132
      // Predicated region
      $region9: #{tpu_custom_call.1} parent=5 // pred_check
        _
      $region10: #{tpu_custom_call.1} parent=5 // pred_check_branch
        %135 = sbr.rel (%p132) target = $region12
      $region11: #{tpu_custom_call.1} parent=5 // pred_region
        %s136 = ssub.s32 %s18, 1
      $region12: #{tpu_custom_call.1} parent=5 // pred_fallthru
        _
      %p137 = scmp.lt.s32.totalorder %s18, 2
      // Predicated region
      $region13: #{tpu_custom_call.1} parent=5 // pred_check
        %p138 = pneg %p137
      $region14: #{tpu_custom_call.1} parent=5 // pred_check_branch
        %140 = sbr.rel (%p138) target = $region16
      $region15: #{tpu_custom_call.1} parent=5 // pred_region
        // Predicated region
        $region17: #{tpu_custom_call.1} parent=15 // pred_check
          %p141 = pneg %p38
        $region18: #{tpu_custom_call.1} parent=15 // pred_check_branch
          %143 = sbr.rel (%p141) target = $region20
        $region19: #{tpu_custom_call.1} parent=15 // pred_region
          %s144 = sand.u32 %s28, 1
          %s145 = scalar_lea.sflag [#allocation3], %s144
          %s146 = sand.u32 %s28, 1
          %s147 = smul.addr %s146, 384
          %s148 = scalar_lea.vmem [#allocation2], %s147
          %s149 = smul.u32 4, %s18
          %s151 = ssub.s32 6144, 6144
          %152 = vsyncadd %s145, %s151
          %s153 = smul.addr %s149, 128
          %s154 = scalar_lea.hbm %s0, %s153
          %s155 = sshll.u32 %s148, 4
          %s156 = int_to_ptr.vmem [resolvable:$true] %s155
          %161 = dma.hbm_to_vmem [thread:$0]  %s154, 6144, %s156, %s145, 1024, 512, 32
        $region20: #{tpu_custom_call.1} parent=15 // pred_fallthru
          _
        // Predicated region
        $region21: #{tpu_custom_call.1} parent=15 // pred_check
          %p162 = pneg %p64
        $region22: #{tpu_custom_call.1} parent=15 // pred_check_branch
          %164 = sbr.rel (%p162) target = $region24
        $region23: #{tpu_custom_call.1} parent=15 // pred_region
          %s165 = sand.u32 %s18, 1
          %s166 = scalar_lea.sflag [#allocation6], %s165
          %s167 = sand.u32 %s54, 1
          %s168 = smul.addr %s167, 16
          %s169 = scalar_lea.vmem [#allocation5], %s168
          %s170 = smul.u32 4, %s18
          %s172 = ssub.s32 256, 256
          %173 = vsyncadd %s166, %s172
          %s174 = smul.addr %s170, 64
          %s175 = scalar_lea.hbm %s1, %s174
          %s177 = sshll.u32 %s169, 4
          %s178 = int_to_ptr.vmem [resolvable:$true] %s177
          %180 = dma.hbm_to_vmem [thread:$0]  %s175, 256, %s178, %s166
        $region24: #{tpu_custom_call.1} parent=15 // pred_fallthru
          _
        // Predicated region
        $region25: #{tpu_custom_call.1} parent=15 // pred_check
          %p181 = pneg %p90
        $region26: #{tpu_custom_call.1} parent=15 // pred_check_branch
          %183 = sbr.rel (%p181) target = $region28
        $region27: #{tpu_custom_call.1} parent=15 // pred_region
          %s184 = sand.u32 %s18, 1
          %s185 = scalar_lea.sflag [#allocation6], %s184
          %s186 = sand.u32 %s80, 1
          %s187 = smul.addr %s186, 128
          %s188 = scalar_lea.vmem [#allocation7], %s187
          %s189 = smul.u32 4, %s18
          %s191 = ssub.s32 2048, 2048
          %192 = vsyncadd %s185, %s191
          %s193 = smul.addr %s189, 128
          %s194 = scalar_lea.hbm %s2, %s193
          %s195 = sshll.u32 %s188, 4
          %s196 = int_to_ptr.vmem [resolvable:$true] %s195
          %201 = dma.hbm_to_vmem [thread:$0]  %s194, 2048, %s196, %s185, 1024, 512, 32
        $region28: #{tpu_custom_call.1} parent=15 // pred_fallthru
          _
      $region16: #{tpu_custom_call.1} parent=5 // pred_fallthru
        _
      %p202 = scmp.le.s32.totalorder 1, %s18
      %p203 = scmp.lt.s32.totalorder %s18, 3
      %p204 = pnand %p202, %p203
      %p205 = pneg %p204
      // Predicated region
      $region29: #{tpu_custom_call.1} parent=5 // pred_check
        _
      $region30: #{tpu_custom_call.1} parent=5 // pred_check_branch
        %207 = sbr.rel (%p204) target = $region32
      $region31: #{tpu_custom_call.1} parent=5 // pred_region
        %s208 = ssub.s32 %s18, 1
        %s209 = sand.u32 %s31, 1
        %s210 = scalar_lea.sflag [#allocation3], %s209
        %s211 = sand.u32 %s31, 1
        %s212 = smul.addr %s211, 384
        %s213 = scalar_lea.vmem [#allocation2], %s212
        // Predicated region
        $region33: #{tpu_custom_call.1} parent=31 // pred_check
          %p214 = pneg %p44
        $region34: #{tpu_custom_call.1} parent=31 // pred_check_branch
          %216 = sbr.rel (%p214) target = $region36
        $region35: #{tpu_custom_call.1} parent=31 // pred_region
          %217 = dma.done %s210, 6144
        $region36: #{tpu_custom_call.1} parent=31 // pred_fallthru
          _
        %s218 = sand.u32 %s23, 1
        %s219 = scalar_lea.sflag [#allocation6], %s218
        %s220 = sand.u32 %s57, 1
        %s221 = smul.addr %s220, 16
        %s222 = scalar_lea.vmem [#allocation5], %s221
        // Predicated region
        $region37: #{tpu_custom_call.1} parent=31 // pred_check
          %p223 = pneg %p70
        $region38: #{tpu_custom_call.1} parent=31 // pred_check_branch
          %225 = sbr.rel (%p223) target = $region40
        $region39: #{tpu_custom_call.1} parent=31 // pred_region
          %226 = dma.done %s219, 256
        $region40: #{tpu_custom_call.1} parent=31 // pred_fallthru
          _
        %s227 = sand.u32 %s23, 1
        %s228 = scalar_lea.sflag [#allocation6], %s227
        %s229 = sand.u32 %s83, 1
        %s230 = smul.addr %s229, 128
        %s231 = scalar_lea.vmem [#allocation7], %s230
        // Predicated region
        $region41: #{tpu_custom_call.1} parent=31 // pred_check
          %p232 = pneg %p96
        $region42: #{tpu_custom_call.1} parent=31 // pred_check_branch
          %234 = sbr.rel (%p232) target = $region44
        $region43: #{tpu_custom_call.1} parent=31 // pred_region
          %235 = dma.done %s228, 2048
        $region44: #{tpu_custom_call.1} parent=31 // pred_fallthru
          _
        %s236 = sand.u32 %s31, 1
        %s237 = scalar_lea.sflag [#allocation3], %s236
        %s238 = sand.u32 %s31, 1
        %s239 = smul.addr %s238, 384
        %s240 = scalar_lea.vmem [#allocation2], %s239
        %p241 = pneg %p44
        %p242 = pneg %p41
        %s243 = sand.u32 %s23, 1
        %s244 = scalar_lea.sflag [#allocation6], %s243
        %s245 = sand.u32 %s57, 1
        %s246 = smul.addr %s245, 16
        %s247 = scalar_lea.vmem [#allocation5], %s246
        %p248 = pneg %p70
        %p249 = pneg %p67
        %s250 = sand.u32 %s23, 1
        %s251 = scalar_lea.sflag [#allocation6], %s250
        %s252 = sand.u32 %s83, 1
        %s253 = smul.addr %s252, 128
        %s254 = scalar_lea.vmem [#allocation7], %s253
        %p255 = pneg %p96
        %p256 = pneg %p93
        %p257 = pneg %p122
        %p258 = pneg %p119
        %s259 = sand.u32 %s109, 1
        %s260 = scalar_lea.sflag [#allocation4], %s259
        %s261 = sand.u32 %s109, 1
        %s262 = smul.addr %s261, 384
        %s263 = scalar_lea.vmem [#allocation8], %s262
        %s264 = smul.u32 4, %s23
        %s265 = smul.u32 4, %s23
        %s266 = smul.u32 4, %s23
        %s267 = smul.u32 4, %s23
        %v268 = vld [vmem:[%s213] sm:$0xff]
        %v269 = vld [vmem:[%s213 + $0x8] sm:$0xff]
        %v270 = vld [vmem:[%s213 + $0x10] sm:$0xff]
        %v271 = vld [vmem:[%s213 + $0x18] sm:$0xff]
        %v272 = vld [vmem:[%s213 + $0x20] sm:$0xff]
        %v273 = vld [vmem:[%s213 + $0x28] sm:$0xff]
        %v274 = vld [vmem:[%s213 + $0x30] sm:$0xff]
        %v275 = vld [vmem:[%s213 + $0x38] sm:$0xff]
        %v276 = vld [vmem:[%s213 + $0x40] sm:$0xff]
        %v277 = vld [vmem:[%s213 + $0x48] sm:$0xff]
        %v278 = vld [vmem:[%s213 + $0x50] sm:$0xff]
        %v279 = vld [vmem:[%s213 + $0x58] sm:$0xff]
        %v280 = vld [vmem:[%s213 + $0x60] sm:$0xff]
        %v281 = vld [vmem:[%s213 + $0x68] sm:$0xff]
        %v282 = vld [vmem:[%s213 + $0x70] sm:$0xff]
        %v283 = vld [vmem:[%s213 + $0x78] sm:$0xff]
        %s284 = scalar_lea.vmem %s213, 128 [#allocation2]
        %v285 = vld [vmem:[%s284] sm:$0xff]
        %v286 = vld [vmem:[%s284 + $0x8] sm:$0xff]
        %v287 = vld [vmem:[%s284 + $0x10] sm:$0xff]
        %v288 = vld [vmem:[%s284 + $0x18] sm:$0xff]
        %v289 = vld [vmem:[%s284 + $0x20] sm:$0xff]
        %v290 = vld [vmem:[%s284 + $0x28] sm:$0xff]
        %v291 = vld [vmem:[%s284 + $0x30] sm:$0xff]
        %v292 = vld [vmem:[%s284 + $0x38] sm:$0xff]
        %v293 = vld [vmem:[%s284 + $0x40] sm:$0xff]
        %v294 = vld [vmem:[%s284 + $0x48] sm:$0xff]
        %v295 = vld [vmem:[%s284 + $0x50] sm:$0xff]
        %v296 = vld [vmem:[%s284 + $0x58] sm:$0xff]
        %v297 = vld [vmem:[%s284 + $0x60] sm:$0xff]
        %v298 = vld [vmem:[%s284 + $0x68] sm:$0xff]
        %v299 = vld [vmem:[%s284 + $0x70] sm:$0xff]
        %v300 = vld [vmem:[%s284 + $0x78] sm:$0xff]
        %s301 = scalar_lea.vmem %s213, 256 [#allocation2]
        %v302 = vld [vmem:[%s301] sm:$0xff]
        %v303 = vld [vmem:[%s301 + $0x8] sm:$0xff]
        %v304 = vld [vmem:[%s301 + $0x10] sm:$0xff]
        %v305 = vld [vmem:[%s301 + $0x18] sm:$0xff]
        %v306 = vld [vmem:[%s301 + $0x20] sm:$0xff]
        %v307 = vld [vmem:[%s301 + $0x28] sm:$0xff]
        %v308 = vld [vmem:[%s301 + $0x30] sm:$0xff]
        %v309 = vld [vmem:[%s301 + $0x38] sm:$0xff]
        %v310 = vld [vmem:[%s301 + $0x40] sm:$0xff]
        %v311 = vld [vmem:[%s301 + $0x48] sm:$0xff]
        %v312 = vld [vmem:[%s301 + $0x50] sm:$0xff]
        %v313 = vld [vmem:[%s301 + $0x58] sm:$0xff]
        %v314 = vld [vmem:[%s301 + $0x60] sm:$0xff]
        %v315 = vld [vmem:[%s301 + $0x68] sm:$0xff]
        %v316 = vld [vmem:[%s301 + $0x70] sm:$0xff]
        %v317 = vld [vmem:[%s301 + $0x78] sm:$0xff]
        %v318 = vld [vmem:[%s222] ss:$4 sm:$0xf]
        %s319 = scalar_lea.vmem %s222, 1 [#allocation5]
        %v320 = vld [vmem:[%s319] ss:$4 sm:$0xf]
        %s321 = scalar_lea.vmem %s222, 2 [#allocation5]
        %v322 = vld [vmem:[%s321] ss:$4 sm:$0xf]
        %v323 = vld [vmem:[%s231] sm:$0xff]
        %v324 = vld [vmem:[%s231 + $0x8] sm:$0xff]
        %v325 = vld [vmem:[%s231 + $0x10] sm:$0xff]
        %v326 = vld [vmem:[%s231 + $0x18] sm:$0xff]
        %v327 = vld [vmem:[%s231 + $0x20] sm:$0xff]
        %v328 = vld [vmem:[%s231 + $0x28] sm:$0xff]
        %v329 = vld [vmem:[%s231 + $0x30] sm:$0xff]
        %v330 = vld [vmem:[%s231 + $0x38] sm:$0xff]
        %v331 = vld [vmem:[%s231 + $0x40] sm:$0xff]
        %v332 = vld [vmem:[%s231 + $0x48] sm:$0xff]
        %v333 = vld [vmem:[%s231 + $0x50] sm:$0xff]
        %v334 = vld [vmem:[%s231 + $0x58] sm:$0xff]
        %v335 = vld [vmem:[%s231 + $0x60] sm:$0xff]
        %v336 = vld [vmem:[%s231 + $0x68] sm:$0xff]
        %v337 = vld [vmem:[%s231 + $0x70] sm:$0xff]
        %v338 = vld [vmem:[%s231 + $0x78] sm:$0xff]
        %v339 = vmul.f32 %v323, 0.70710677
        %v340 = vmul.f32 %v324, 0.70710677
        %v341 = vmul.f32 %v325, 0.70710677
        %v342 = vmul.f32 %v326, 0.70710677
        %v343 = vmul.f32 %v327, 0.70710677
        %v344 = vmul.f32 %v328, 0.70710677
        %v345 = vmul.f32 %v329, 0.70710677
        %v346 = vmul.f32 %v330, 0.70710677
        %v347 = vmul.f32 %v331, 0.70710677
        %v348 = vmul.f32 %v332, 0.70710677
        %v349 = vmul.f32 %v333, 0.70710677
        %v350 = vmul.f32 %v334, 0.70710677
        %v351 = vmul.f32 %v335, 0.70710677
        %v352 = vmul.f32 %v336, 0.70710677
        %v353 = vmul.f32 %v337, 0.70710677
        %v354 = vmul.f32 %v338, 0.70710677
        %v356 = vlaneseq
        %v357 = vshrl.u32 %v356, 7
        %v358 = vsub.s32 0, %v357
        %v359 = vrot.slane %v322, %v358
        %v360 = vlaneseq
        %v361 = vshrl.u32 %v360, 7
        %v362 = vsub.s32 1, %v361
        %v363 = vrot.slane %v322, %v362
        %v364 = vlaneseq
        %v365 = vshrl.u32 %v364, 7
        %v366 = vsub.s32 2, %v365
        %v367 = vrot.slane %v322, %v366
        %v368 = vlaneseq
        %v369 = vshrl.u32 %v368, 7
        %v370 = vsub.s32 3, %v369
        %v371 = vrot.slane %v322, %v370
        %v376 = vmul.f32 %v285, %v359
        %v377 = vmul.f32 %v286, %v363
        %v378 = vmul.f32 %v287, %v367
        %v379 = vmul.f32 %v288, %v371
        %v380 = vmul.f32 %v289, %v359
        %v381 = vmul.f32 %v290, %v363
        %v382 = vmul.f32 %v291, %v367
        %v383 = vmul.f32 %v292, %v371
        %v384 = vmul.f32 %v293, %v359
        %v385 = vmul.f32 %v294, %v363
        %v386 = vmul.f32 %v295, %v367
        %v387 = vmul.f32 %v296, %v371
        %v388 = vmul.f32 %v297, %v359
        %v389 = vmul.f32 %v298, %v363
        %v390 = vmul.f32 %v299, %v367
        %v391 = vmul.f32 %v300, %v371
        %v393 = vlaneseq
        %v394 = vshrl.u32 %v393, 7
        %v395 = vsub.s32 0, %v394
        %v396 = vrot.slane %v320, %v395
        %v397 = vlaneseq
        %v398 = vshrl.u32 %v397, 7
        %v399 = vsub.s32 1, %v398
        %v400 = vrot.slane %v320, %v399
        %v401 = vlaneseq
        %v402 = vshrl.u32 %v401, 7
        %v403 = vsub.s32 2, %v402
        %v404 = vrot.slane %v320, %v403
        %v405 = vlaneseq
        %v406 = vshrl.u32 %v405, 7
        %v407 = vsub.s32 3, %v406
        %v408 = vrot.slane %v320, %v407
        %v413 = vmul.f32 %v302, %v396
        %v414 = vmul.f32 %v303, %v400
        %v415 = vmul.f32 %v304, %v404
        %v416 = vmul.f32 %v305, %v408
        %v417 = vmul.f32 %v306, %v396
        %v418 = vmul.f32 %v307, %v400
        %v419 = vmul.f32 %v308, %v404
        %v420 = vmul.f32 %v309, %v408
        %v421 = vmul.f32 %v310, %v396
        %v422 = vmul.f32 %v311, %v400
        %v423 = vmul.f32 %v312, %v404
        %v424 = vmul.f32 %v313, %v408
        %v425 = vmul.f32 %v314, %v396
        %v426 = vmul.f32 %v315, %v400
        %v427 = vmul.f32 %v316, %v404
        %v428 = vmul.f32 %v317, %v408
        %v429 = vsub.f32 %v376, %v413
        %v430 = vsub.f32 %v377, %v414
        %v431 = vsub.f32 %v378, %v415
        %v432 = vsub.f32 %v379, %v416
        %v433 = vsub.f32 %v380, %v417
        %v434 = vsub.f32 %v381, %v418
        %v435 = vsub.f32 %v382, %v419
        %v436 = vsub.f32 %v383, %v420
        %v437 = vsub.f32 %v384, %v421
        %v438 = vsub.f32 %v385, %v422
        %v439 = vsub.f32 %v386, %v423
        %v440 = vsub.f32 %v387, %v424
        %v441 = vsub.f32 %v388, %v425
        %v442 = vsub.f32 %v389, %v426
        %v443 = vsub.f32 %v390, %v427
        %v444 = vsub.f32 %v391, %v428
        %v445 = vmul.f32 %v339, %v429
        %v446 = vmul.f32 %v340, %v430
        %v447 = vmul.f32 %v341, %v431
        %v448 = vmul.f32 %v342, %v432
        %v449 = vmul.f32 %v343, %v433
        %v450 = vmul.f32 %v344, %v434
        %v451 = vmul.f32 %v345, %v435
        %v452 = vmul.f32 %v346, %v436
        %v453 = vmul.f32 %v347, %v437
        %v454 = vmul.f32 %v348, %v438
        %v455 = vmul.f32 %v349, %v439
        %v456 = vmul.f32 %v350, %v440
        %v457 = vmul.f32 %v351, %v441
        %v458 = vmul.f32 %v352, %v442
        %v459 = vmul.f32 %v353, %v443
        %v460 = vmul.f32 %v354, %v444
        %461 = vst [vmem:[%s263] sm:$0xff] %v445
        %462 = vst [vmem:[%s263 + $0x8] sm:$0xff] %v446
        %463 = vst [vmem:[%s263 + $0x10] sm:$0xff] %v447
        %464 = vst [vmem:[%s263 + $0x18] sm:$0xff] %v448
        %465 = vst [vmem:[%s263 + $0x20] sm:$0xff] %v449
        %466 = vst [vmem:[%s263 + $0x28] sm:$0xff] %v450
        %467 = vst [vmem:[%s263 + $0x30] sm:$0xff] %v451
        %468 = vst [vmem:[%s263 + $0x38] sm:$0xff] %v452
        %469 = vst [vmem:[%s263 + $0x40] sm:$0xff] %v453
        %470 = vst [vmem:[%s263 + $0x48] sm:$0xff] %v454
        %471 = vst [vmem:[%s263 + $0x50] sm:$0xff] %v455
        %472 = vst [vmem:[%s263 + $0x58] sm:$0xff] %v456
        %473 = vst [vmem:[%s263 + $0x60] sm:$0xff] %v457
        %474 = vst [vmem:[%s263 + $0x68] sm:$0xff] %v458
        %475 = vst [vmem:[%s263 + $0x70] sm:$0xff] %v459
        %476 = vst [vmem:[%s263 + $0x78] sm:$0xff] %v460
        %v478 = vlaneseq
        %v479 = vshrl.u32 %v478, 7
        %v480 = vsub.s32 0, %v479
        %v481 = vrot.slane %v318, %v480
        %v482 = vlaneseq
        %v483 = vshrl.u32 %v482, 7
        %v484 = vsub.s32 1, %v483
        %v485 = vrot.slane %v318, %v484
        %v486 = vlaneseq
        %v487 = vshrl.u32 %v486, 7
        %v488 = vsub.s32 2, %v487
        %v489 = vrot.slane %v318, %v488
        %v490 = vlaneseq
        %v491 = vshrl.u32 %v490, 7
        %v492 = vsub.s32 3, %v491
        %v493 = vrot.slane %v318, %v492
        %v498 = vmul.f32 %v302, %v481
        %v499 = vmul.f32 %v303, %v485
        %v500 = vmul.f32 %v304, %v489
        %v501 = vmul.f32 %v305, %v493
        %v502 = vmul.f32 %v306, %v481
        %v503 = vmul.f32 %v307, %v485
        %v504 = vmul.f32 %v308, %v489
        %v505 = vmul.f32 %v309, %v493
        %v506 = vmul.f32 %v310, %v481
        %v507 = vmul.f32 %v311, %v485
        %v508 = vmul.f32 %v312, %v489
        %v509 = vmul.f32 %v313, %v493
        %v510 = vmul.f32 %v314, %v481
        %v511 = vmul.f32 %v315, %v485
        %v512 = vmul.f32 %v316, %v489
        %v513 = vmul.f32 %v317, %v493
        %v514 = vmul.f32 %v268, %v359
        %v515 = vmul.f32 %v269, %v363
        %v516 = vmul.f32 %v270, %v367
        %v517 = vmul.f32 %v271, %v371
        %v518 = vmul.f32 %v272, %v359
        %v519 = vmul.f32 %v273, %v363
        %v520 = vmul.f32 %v274, %v367
        %v521 = vmul.f32 %v275, %v371
        %v522 = vmul.f32 %v276, %v359
        %v523 = vmul.f32 %v277, %v363
        %v524 = vmul.f32 %v278, %v367
        %v525 = vmul.f32 %v279, %v371
        %v526 = vmul.f32 %v280, %v359
        %v527 = vmul.f32 %v281, %v363
        %v528 = vmul.f32 %v282, %v367
        %v529 = vmul.f32 %v283, %v371
        %v530 = vsub.f32 %v498, %v514
        %v531 = vsub.f32 %v499, %v515
        %v532 = vsub.f32 %v500, %v516
        %v533 = vsub.f32 %v501, %v517
        %v534 = vsub.f32 %v502, %v518
        %v535 = vsub.f32 %v503, %v519
        %v536 = vsub.f32 %v504, %v520
        %v537 = vsub.f32 %v505, %v521
        %v538 = vsub.f32 %v506, %v522
        %v539 = vsub.f32 %v507, %v523
        %v540 = vsub.f32 %v508, %v524
        %v541 = vsub.f32 %v509, %v525
        %v542 = vsub.f32 %v510, %v526
        %v543 = vsub.f32 %v511, %v527
        %v544 = vsub.f32 %v512, %v528
        %v545 = vsub.f32 %v513, %v529
        %v546 = vmul.f32 %v339, %v530
        %v547 = vmul.f32 %v340, %v531
        %v548 = vmul.f32 %v341, %v532
        %v549 = vmul.f32 %v342, %v533
        %v550 = vmul.f32 %v343, %v534
        %v551 = vmul.f32 %v344, %v535
        %v552 = vmul.f32 %v345, %v536
        %v553 = vmul.f32 %v346, %v537
        %v554 = vmul.f32 %v347, %v538
        %v555 = vmul.f32 %v348, %v539
        %v556 = vmul.f32 %v349, %v540
        %v557 = vmul.f32 %v350, %v541
        %v558 = vmul.f32 %v351, %v542
        %v559 = vmul.f32 %v352, %v543
        %v560 = vmul.f32 %v353, %v544
        %v561 = vmul.f32 %v354, %v545
        %s562 = scalar_lea.vmem %s263, 128 [#allocation8]
        %563 = vst [vmem:[%s562] sm:$0xff] %v546
        %564 = vst [vmem:[%s562 + $0x8] sm:$0xff] %v547
        %565 = vst [vmem:[%s562 + $0x10] sm:$0xff] %v548
        %566 = vst [vmem:[%s562 + $0x18] sm:$0xff] %v549
        %567 = vst [vmem:[%s562 + $0x20] sm:$0xff] %v550
        %568 = vst [vmem:[%s562 + $0x28] sm:$0xff] %v551
        %569 = vst [vmem:[%s562 + $0x30] sm:$0xff] %v552
        %570 = vst [vmem:[%s562 + $0x38] sm:$0xff] %v553
        %571 = vst [vmem:[%s562 + $0x40] sm:$0xff] %v554
        %572 = vst [vmem:[%s562 + $0x48] sm:$0xff] %v555
        %573 = vst [vmem:[%s562 + $0x50] sm:$0xff] %v556
        %574 = vst [vmem:[%s562 + $0x58] sm:$0xff] %v557
        %575 = vst [vmem:[%s562 + $0x60] sm:$0xff] %v558
        %576 = vst [vmem:[%s562 + $0x68] sm:$0xff] %v559
        %577 = vst [vmem:[%s562 + $0x70] sm:$0xff] %v560
        %578 = vst [vmem:[%s562 + $0x78] sm:$0xff] %v561
        %v579 = vmul.f32 %v268, %v396
        %v580 = vmul.f32 %v269, %v400
        %v581 = vmul.f32 %v270, %v404
        %v582 = vmul.f32 %v271, %v408
        %v583 = vmul.f32 %v272, %v396
        %v584 = vmul.f32 %v273, %v400
        %v585 = vmul.f32 %v274, %v404
        %v586 = vmul.f32 %v275, %v408
        %v587 = vmul.f32 %v276, %v396
        %v588 = vmul.f32 %v277, %v400
        %v589 = vmul.f32 %v278, %v404
        %v590 = vmul.f32 %v279, %v408
        %v591 = vmul.f32 %v280, %v396
        %v592 = vmul.f32 %v281, %v400
        %v593 = vmul.f32 %v282, %v404
        %v594 = vmul.f32 %v283, %v408
        %v595 = vmul.f32 %v285, %v481
        %v596 = vmul.f32 %v286, %v485
        %v597 = vmul.f32 %v287, %v489
        %v598 = vmul.f32 %v288, %v493
        %v599 = vmul.f32 %v289, %v481
        %v600 = vmul.f32 %v290, %v485
        %v601 = vmul.f32 %v291, %v489
        %v602 = vmul.f32 %v292, %v493
        %v603 = vmul.f32 %v293, %v481
        %v604 = vmul.f32 %v294, %v485
        %v605 = vmul.f32 %v295, %v489
        %v606 = vmul.f32 %v296, %v493
        %v607 = vmul.f32 %v297, %v481
        %v608 = vmul.f32 %v298, %v485
        %v609 = vmul.f32 %v299, %v489
        %v610 = vmul.f32 %v300, %v493
        %v611 = vsub.f32 %v579, %v595
        %v612 = vsub.f32 %v580, %v596
        %v613 = vsub.f32 %v581, %v597
        %v614 = vsub.f32 %v582, %v598
        %v615 = vsub.f32 %v583, %v599
        %v616 = vsub.f32 %v584, %v600
        %v617 = vsub.f32 %v585, %v601
        %v618 = vsub.f32 %v586, %v602
        %v619 = vsub.f32 %v587, %v603
        %v620 = vsub.f32 %v588, %v604
        %v621 = vsub.f32 %v589, %v605
        %v622 = vsub.f32 %v590, %v606
        %v623 = vsub.f32 %v591, %v607
        %v624 = vsub.f32 %v592, %v608
        %v625 = vsub.f32 %v593, %v609
        %v626 = vsub.f32 %v594, %v610
        %v627 = vmul.f32 %v339, %v611
        %v628 = vmul.f32 %v340, %v612
        %v629 = vmul.f32 %v341, %v613
        %v630 = vmul.f32 %v342, %v614
        %v631 = vmul.f32 %v343, %v615
        %v632 = vmul.f32 %v344, %v616
        %v633 = vmul.f32 %v345, %v617
        %v634 = vmul.f32 %v346, %v618
        %v635 = vmul.f32 %v347, %v619
        %v636 = vmul.f32 %v348, %v620
        %v637 = vmul.f32 %v349, %v621
        %v638 = vmul.f32 %v350, %v622
        %v639 = vmul.f32 %v351, %v623
        %v640 = vmul.f32 %v352, %v624
        %v641 = vmul.f32 %v353, %v625
        %v642 = vmul.f32 %v354, %v626
        %s643 = scalar_lea.vmem %s263, 256 [#allocation8]
        %644 = vst [vmem:[%s643] sm:$0xff] %v627
        %645 = vst [vmem:[%s643 + $0x8] sm:$0xff] %v628
        %646 = vst [vmem:[%s643 + $0x10] sm:$0xff] %v629
        %647 = vst [vmem:[%s643 + $0x18] sm:$0xff] %v630
        %648 = vst [vmem:[%s643 + $0x20] sm:$0xff] %v631
        %649 = vst [vmem:[%s643 + $0x28] sm:$0xff] %v632
        %650 = vst [vmem:[%s643 + $0x30] sm:$0xff] %v633
        %651 = vst [vmem:[%s643 + $0x38] sm:$0xff] %v634
        %652 = vst [vmem:[%s643 + $0x40] sm:$0xff] %v635
        %653 = vst [vmem:[%s643 + $0x48] sm:$0xff] %v636
        %654 = vst [vmem:[%s643 + $0x50] sm:$0xff] %v637
        %655 = vst [vmem:[%s643 + $0x58] sm:$0xff] %v638
        %656 = vst [vmem:[%s643 + $0x60] sm:$0xff] %v639
        %657 = vst [vmem:[%s643 + $0x68] sm:$0xff] %v640
        %658 = vst [vmem:[%s643 + $0x70] sm:$0xff] %v641
        %659 = vst [vmem:[%s643 + $0x78] sm:$0xff] %v642
        %s660 = sand.u32 %s109, 1
        %s661 = scalar_lea.sflag [#allocation4], %s660
        %s662 = sand.u32 %s109, 1
        %s663 = smul.addr %s662, 384
        %s664 = scalar_lea.vmem [#allocation8], %s663
        // Predicated region
        $region45: #{tpu_custom_call.1} parent=31 // pred_check
          %p665 = pneg %p119
        $region46: #{tpu_custom_call.1} parent=31 // pred_check_branch
          %667 = sbr.rel (%p665) target = $region48
        $region47: #{tpu_custom_call.1} parent=31 // pred_region
          %s668 = smul.u32 4, %s23
          %s670 = ssub.s32 6144, 6144
          %671 = vsyncadd %s661, %s670
          %s672 = smul.addr %s668, 128
          %s673 = scalar_lea.hbm %s3, %s672
          %s674 = sshll.u32 %s664, 4
          %s675 = int_to_ptr.vmem [resolvable:$true] %s674
          %680 = dma.vmem_to_hbm [thread:$0]  %s675, 6144, %s673, %s661, 512, 1024, 32
        $region48: #{tpu_custom_call.1} parent=31 // pred_fallthru
          _
      $region32: #{tpu_custom_call.1} parent=5 // pred_fallthru
        _
      %p681 = scmp.le.s32.totalorder 2, %s18
      // Predicated region
      $region49: #{tpu_custom_call.1} parent=5 // pred_check
        %p682 = pneg %p681
      $region50: #{tpu_custom_call.1} parent=5 // pred_check_branch
        %684 = sbr.rel (%p682) target = $region52
      $region51: #{tpu_custom_call.1} parent=5 // pred_region
        %s685 = ssub.s32 %s18, 2
        // Predicated region
        $region53: #{tpu_custom_call.1} parent=51 // pred_check
          %p686 = pneg %p125
        $region54: #{tpu_custom_call.1} parent=51 // pred_check_branch
          %688 = sbr.rel (%p686) target = $region56
        $region55: #{tpu_custom_call.1} parent=51 // pred_region
          %s689 = sand.u32 %s110, 1
          %s690 = scalar_lea.sflag [#allocation4], %s689
          %s691 = sand.u32 %s110, 1
          %s692 = smul.addr %s691, 384
          %s693 = scalar_lea.vmem [#allocation8], %s692
          %694 = dma.done %s690, 6144
        $region56: #{tpu_custom_call.1} parent=51 // pred_fallthru
          _
      $region52: #{tpu_custom_call.1} parent=5 // pred_fallthru
        _
    $region6: #{tpu_custom_call.1} parent=1 // loop_footer
      %s22 = sadd.s32 1, %s18
    $region7: #{tpu_custom_call.1} parent=1 // loop_footer_branch
      %17 = sbr.rel target = $region3
    $region8: #{tpu_custom_call.1} parent=1 // loop_exit
      _
    %695 = vsyncpa [#allocation3], 1
    %s696 = scalar_lea.sflag [#allocation3], 1
    %697 = vsyncpa %s696, 1
    %698 = vsyncpa [#allocation6], 1
    %s699 = scalar_lea.sflag [#allocation6], 1
    %700 = vsyncpa %s699, 1
    %701 = vsyncpa [#allocation4], 1
    %s702 = scalar_lea.sflag [#allocation4], 1
    %703 = vsyncpa %s702, 1

</llo_original>
